<compile_context>
chip_gen: v6e
topology: v6e:2x2x1
jax: 0.10.0
libtpu: 0.0.40
codegen_flags: <defaults>
</compile_context>

<pallas_src>
import functools

import jax
import jax.numpy as jnp
from jax import lax
from jax.experimental import pallas as pl
from jax.experimental.pallas import tpu as pltpu

FEAT = 20
PACK = 6                   # rows packed per 120-lane packed row
PACKED = PACK * FEAT       # 120 live lanes out of 128
DEFAULT_TM = 8192          # packed rows / grid step: 4 MiB padded VMEM per buffer.
                           # v5e/v6e: can raise to 16384-32768 (and vmem limit to 64 MiB).
SMALL_N = 2048             # below this, a fused XLA path beats kernel launch cost
# TODO(synk): optionally add pipeline_mode=pl.Buffered(3) on the x BlockSpec for v7x.


def _halving_and_sum(abs_sum, total):
    # `while h.abs().sum() > 1: h /= 2` scales h by 2^-k with k the smallest
    # k >= 0 such that abs_sum <= 2^k (halving is an exact f32 scaling).
    m, e = jnp.frexp(abs_sum)                       # abs_sum = m * 2^e, m in [0.5, 1)
    k = jnp.maximum(jnp.where(m == 0.5, e - 1, e), 0)
    return jnp.ldexp(total, -k)


def _fixed_hidden_mlp_kernel(x_ref, g_ref, a_ref, c_ref, wt_ref, b_ref,
                             abs_ref, tot_ref, *, n_rows, tm, ragged):
    i = pl.program_id(0)
    x = x_ref[...]                                   # (tm, 120) f32, 6 rows per packed row

    # Folded first two ops: relu((x@W.T+b)@rw + 1) == relu(x@(W.T@rw) + (b@rw+1)),
    # applied lane-group-wise via block-diagonal weights.
    h = jnp.dot(x, a_ref[...], preferred_element_type=jnp.float32) + c_ref[...]
    h = jnp.maximum(h, 0.0)
    # Second application of the shared Linear: h @ W.T + b (block-diagonal W.T).
    h = jnp.dot(h, wt_ref[...], preferred_element_type=jnp.float32) + b_ref[...]

    def store(hh):
        abs_ref[...] = jnp.sum(jnp.abs(hh), axis=0, keepdims=True)[None]   # (1,1,120)
        tot_ref[...] = jnp.sum(hh, axis=0, keepdims=True)[None]            # (1,1,120)

    if ragged:
        last = pl.num_programs(0) - 1

        @pl.when(i == last)
        def _():
            # Per-lane-group mask: original row = (global packed row)*PACK + group,
            # where group (= lane // FEAT) is supplied as a resident int32 (1,120) input.
            r = lax.broadcasted_iota(jnp.int32, (tm, 1), 0)
            orig = (i * tm + r) * PACK + g_ref[...]          # (tm, 120) original row ids
            store(jnp.where(orig < n_rows, h, 0.0))

        @pl.when(i != last)
        def _():
            store(h)
    else:
        store(h)


def fixed_hidden_mlp(x, w, b, rand_weight, *, tm=DEFAULT_TM, small_n_threshold=SMALL_N):
    """x: (N, 20) f32; w, rand_weight: (20, 20); b: (20,). Returns scalar f32."""
    n, feat = x.shape
    assert feat == FEAT

    # Tiny (20x20) weight algebra stays in plain JAX (glue, not the hot loop).
    wt = w.T                                       # (20, 20) == W.T
    a = wt @ rand_weight                           # folded:  W.T @ rand_weight
    c = (b @ rand_weight + 1.0).reshape(1, feat)   # folded:  b @ rand_weight + 1
    b2 = b.reshape(1, feat)

    if n < small_n_threshold:
        # Tiny batch: kernel launch + pipeline prologue dominates; fused XLA path.
        h = jnp.maximum(x @ a + c, 0.0) @ wt + b2
        return _halving_and_sum(jnp.sum(jnp.abs(h)), jnp.sum(h))

    # --- Lane packing: block-diagonal weights operate on 6 rows at once. ---
    a_bd = jnp.kron(jnp.eye(PACK, dtype=a.dtype), a)      # (120, 120)
    wt_bd = jnp.kron(jnp.eye(PACK, dtype=wt.dtype), wt)   # (120, 120)
    c_p = jnp.tile(c, (1, PACK))                           # (1, 120)
    b_p = jnp.tile(b2, (1, PACK))                          # (1, 120)
    groups = jnp.repeat(jnp.arange(PACK, dtype=jnp.int32), feat).reshape(1, PACKED)

    n_packed = pl.cdiv(n, PACK)                            # packed rows needed
    # Tile: multiple of 8 sublanes, capped so there are >= 2 tiles when possible
    # (megacore 'parallel' sharding on v7x), and capped at DEFAULT_TM for VMEM.
    tm = max(8, min(int(tm), ((pl.cdiv(n_packed, 2) + 7) // 8) * 8))
    num_tiles = pl.cdiv(n_packed, tm)
    n_pad = num_tiles * tm * PACK
    ragged = n_pad != n
    if ragged:
        x = jnp.pad(x, ((0, n_pad - n), (0, 0)))
    x_packed = x.reshape(num_tiles * tm, PACKED)           # contiguous reshape

    kernel = functools.partial(_fixed_hidden_mlp_kernel,
                               n_rows=n, tm=tm, ragged=ragged)

    abs_parts, tot_parts = pl.pallas_call(
        kernel,
        out_shape=(jax.ShapeDtypeStruct((num_tiles, 1, PACKED), jnp.float32),
                   jax.ShapeDtypeStruct((num_tiles, 1, PACKED), jnp.float32)),
        grid=(num_tiles,),
        in_specs=[
            pl.BlockSpec((tm, PACKED), lambda i: (i, 0)),         # x: streamed / pipelined
            pl.BlockSpec((1, PACKED), lambda i: (0, 0)),          # lane-group ids (resident)
            pl.BlockSpec((PACKED, PACKED), lambda i: (0, 0)),     # blockdiag(W.T @ rw)
            pl.BlockSpec((1, PACKED), lambda i: (0, 0)),          # tiled (b @ rw + 1)
            pl.BlockSpec((PACKED, PACKED), lambda i: (0, 0)),     # blockdiag(W.T)
            pl.BlockSpec((1, PACKED), lambda i: (0, 0)),          # tiled b
        ],
        out_specs=(pl.BlockSpec((1, 1, PACKED), lambda i: (i, 0, 0)),
                   pl.BlockSpec((1, 1, PACKED), lambda i: (i, 0, 0))),
        compiler_params=pltpu.CompilerParams(
            dimension_semantics=("parallel",),       # independent tiles -> both TCs on v7x
            vmem_limit_bytes=48 * 1024 * 1024,       # <= ~48 MiB: safe on v7x's 64 MiB VMEM
        ),
    )(x_packed, groups, a_bd, c_p, wt_bd, b_p)

    # Tiny epilogue in plain JAX: combine per-tile partials, exact closed-form halving.
    return _halving_and_sum(jnp.sum(abs_parts), jnp.sum(tot_parts))


if __name__ == "__main__":
    key = jax.random.PRNGKey(0)
    k_x, k_rw, k_w, k_b = jax.random.split(key, 4)

    # rand_weight ~ U[0, 1)  (torch.rand((20, 20)))
    rand_weight = jax.random.uniform(k_rw, (FEAT, FEAT), dtype=jnp.float32)

    # nn.Linear(20, 20) default init: U(-1/sqrt(20), 1/sqrt(20)) for W and b
    bound = 1.0 / float(jnp.sqrt(jnp.float32(FEAT)))
    w = jax.random.uniform(k_w, (FEAT, FEAT), dtype=jnp.float32,
                           minval=-bound, maxval=bound)
    b = jax.random.uniform(k_b, (FEAT,), dtype=jnp.float32,
                           minval=-bound, maxval=bound)

    # Pure-JAX reference (exact PyTorch semantics: halve the full tensor).
    def ref(x, w, b, rw):
        h = x @ w.T + b
        h = jnp.maximum(h @ rw + 1.0, 0.0)
        h = h @ w.T + b
        h = lax.while_loop(lambda t: jnp.sum(jnp.abs(t)) > 1.0, lambda t: t / 2.0, h)
        return jnp.sum(h)

    # Small batch (module's nominal usage, N=2): force the Pallas path (bypass
    # the small-N XLA fallback) so the kernel itself is exercised.
    run_small = jax.jit(functools.partial(fixed_hidden_mlp, small_n_threshold=0))
    x_small = jax.random.normal(k_x, (2, FEAT), dtype=jnp.float32)
    out_small = jax.block_until_ready(run_small(x_small, w, b, rand_weight))
    exp_small = ref(x_small, w, b, rand_weight)
    assert jnp.allclose(out_small, exp_small, rtol=1e-4, atol=1e-5), (out_small, exp_small)

    # Larger batch: exercises multiple tiles, lane packing and the ragged
    # per-lane-group mask through the default kernel path.
    run_big = jax.jit(fixed_hidden_mlp)
    x_big = jax.random.normal(k_x, (4000, FEAT), dtype=jnp.float32)
    out_big = jax.block_until_ready(run_big(x_big, w, b, rand_weight))
    exp_big = ref(x_big, w, b, rand_weight)
    assert jnp.allclose(out_big, exp_big, rtol=1e-4, atol=1e-5), (out_big, exp_big)

    print("KERNEL_OK")
</pallas_src>

<mosaic_0001>
module attributes {stable_mosaic.version = 11 : i64} {
  func.func @_fixed_hidden_mlp_kernel(%arg0: i32, %arg1: memref<8x120xf32, #tpu.memory_space<vmem>>, %arg2: memref<1x120xi32, #tpu.memory_space<vmem>>, %arg3: memref<120x120xf32, #tpu.memory_space<vmem>>, %arg4: memref<1x120xf32, #tpu.memory_space<vmem>>, %arg5: memref<120x120xf32, #tpu.memory_space<vmem>>, %arg6: memref<1x120xf32, #tpu.memory_space<vmem>>, %arg7: memref<1x1x120xf32, #tpu.memory_space<vmem>>, %arg8: memref<1x1x120xf32, #tpu.memory_space<vmem>>) attributes {dimension_semantics = [#tpu.dimension_semantics<parallel>], iteration_bounds = array<i64: 1>, scalar_prefetch = 0 : i64, scratch_operands = 0 : i64, tpu.core_type = #tpu.core_type<tc>, window_params = [{transform_indices = @transform_0, window_bounds = array<i64: 8, 120>}, {pipeline_mode = #tpu.pipeline_mode<synchronous>, transform_indices = @transform_1, window_bounds = array<i64: 1, 120>}, {pipeline_mode = #tpu.pipeline_mode<synchronous>, transform_indices = @transform_2, window_bounds = array<i64: 120, 120>}, {pipeline_mode = #tpu.pipeline_mode<synchronous>, transform_indices = @transform_3, window_bounds = array<i64: 1, 120>}, {pipeline_mode = #tpu.pipeline_mode<synchronous>, transform_indices = @transform_4, window_bounds = array<i64: 120, 120>}, {pipeline_mode = #tpu.pipeline_mode<synchronous>, transform_indices = @transform_5, window_bounds = array<i64: 1, 120>}, {transform_indices = @transform_6, window_bounds = array<i64: 1, 1, 120>}, {transform_indices = @transform_7, window_bounds = array<i64: 1, 1, 120>}]} {
    %c0 = arith.constant 0 : index
    %c0_0 = arith.constant 0 : index
    %0 = vector.load %arg1[%c0, %c0_0] : memref<8x120xf32, #tpu.memory_space<vmem>>, vector<8x120xf32>
    %c0_1 = arith.constant 0 : index
    %c0_2 = arith.constant 0 : index
    %1 = vector.load %arg3[%c0_1, %c0_2] : memref<120x120xf32, #tpu.memory_space<vmem>>, vector<120x120xf32>
    %cst = arith.constant dense<0.000000e+00> : vector<8x120xf32>
    %2 = tpu.matmul %0, %1, %cst {dimension_numbers = #tpu.dot_dimension_numbers<[1], [0], [0], [1], [0, 0, 1, 1], [], []>} : vector<8x120xf32>, vector<120x120xf32>, vector<8x120xf32> -> vector<8x120xf32>
    %c0_3 = arith.constant 0 : index
    %c0_4 = arith.constant 0 : index
    %3 = vector.load %arg4[%c0_3, %c0_4] : memref<1x120xf32, #tpu.memory_space<vmem>>, vector<1x120xf32>
    %4 = vector.broadcast %3 : vector<1x120xf32> to vector<8x120xf32>
    %5 = arith.addf %2, %4 : vector<8x120xf32>
    %cst_5 = arith.constant 0.000000e+00 : f32
    %6 = vector.broadcast %cst_5 : f32 to vector<8x120xf32>
    %7 = arith.maximumf %5, %6 : vector<8x120xf32>
    %c0_6 = arith.constant 0 : index
    %c0_7 = arith.constant 0 : index
    %8 = vector.load %arg5[%c0_6, %c0_7] : memref<120x120xf32, #tpu.memory_space<vmem>>, vector<120x120xf32>
    %cst_8 = arith.constant dense<0.000000e+00> : vector<8x120xf32>
    %9 = tpu.matmul %7, %8, %cst_8 {dimension_numbers = #tpu.dot_dimension_numbers<[1], [0], [0], [1], [0, 0, 1, 1], [], []>} : vector<8x120xf32>, vector<120x120xf32>, vector<8x120xf32> -> vector<8x120xf32>
    %c0_9 = arith.constant 0 : index
    %c0_10 = arith.constant 0 : index
    %10 = vector.load %arg6[%c0_9, %c0_10] : memref<1x120xf32, #tpu.memory_space<vmem>>, vector<1x120xf32>
    %11 = vector.broadcast %10 : vector<1x120xf32> to vector<8x120xf32>
    %12 = arith.addf %9, %11 : vector<8x120xf32>
    %c0_i32 = arith.constant 0 : i32
    %13 = arith.cmpi eq, %arg0, %c0_i32 : i32
    %14 = arith.extui %13 : i1 to i32
    %c0_i32_11 = arith.constant 0 : i32
    %15 = arith.cmpi ne, %14, %c0_i32_11 : i32
    scf.if %15 {
      %19 = tpu.iota {dimensions = array<i32: 0>} : vector<8x1xi32>
      %c8_i32 = arith.constant 8 : i32
      %20 = arith.muli %arg0, %c8_i32 : i32
      %21 = vector.broadcast %20 : i32 to vector<8x1xi32>
      %22 = arith.addi %21, %19 : vector<8x1xi32>
      %c6_i32 = arith.constant 6 : i32
      %23 = vector.broadcast %c6_i32 : i32 to vector<8x1xi32>
      %24 = arith.muli %22, %23 : vector<8x1xi32>
      %c0_14 = arith.constant 0 : index
      %c0_15 = arith.constant 0 : index
      %25 = vector.load %arg2[%c0_14, %c0_15] : memref<1x120xi32, #tpu.memory_space<vmem>>, vector<1x120xi32>
      %26 = vector.broadcast %24 : vector<8x1xi32> to vector<8x120xi32>
      %27 = vector.broadcast %25 : vector<1x120xi32> to vector<8x120xi32>
      %28 = arith.addi %26, %27 : vector<8x120xi32>
      %c2_i32 = arith.constant 2 : i32
      %29 = vector.broadcast %c2_i32 : i32 to vector<8x120xi32>
      %30 = arith.cmpi slt, %28, %29 : vector<8x120xi32>
      %cst_16 = arith.constant 0.000000e+00 : f32
      %31 = vector.broadcast %cst_16 : f32 to vector<8x120xf32>
      %32 = arith.select %30, %12, %31 : vector<8x120xi1>, vector<8x120xf32>
      %33 = math.absf %32 : vector<8x120xf32>
      %cst_17 = arith.constant dense<0.000000e+00> : vector<120xf32>
      %34 = vector.multi_reduction <add>, %33, %cst_17 [0] : vector<8x120xf32> to vector<120xf32>
      %35 = vector.shape_cast %34 : vector<120xf32> to vector<1x120xf32>
      %36 = vector.shape_cast %35 : vector<1x120xf32> to vector<1x1x120xf32>
      %c0_18 = arith.constant 0 : index
      %c0_19 = arith.constant 0 : index
      %c0_20 = arith.constant 0 : index
      %37 = vector.load %arg7[%c0_18, %c0_19, %c0_20] : memref<1x1x120xf32, #tpu.memory_space<vmem>>, vector<1x1x120xf32>
      tpu.vector_store %arg7[%c0_18, %c0_19, %c0_20], %36 {strides = array<i32>} : memref<1x1x120xf32, #tpu.memory_space<vmem>>, vector<1x1x120xf32>,
      %cst_21 = arith.constant dense<0.000000e+00> : vector<120xf32>
      %38 = vector.multi_reduction <add>, %32, %cst_21 [0] : vector<8x120xf32> to vector<120xf32>
      %39 = vector.shape_cast %38 : vector<120xf32> to vector<1x120xf32>
      %40 = vector.shape_cast %39 : vector<1x120xf32> to vector<1x1x120xf32>
      %c0_22 = arith.constant 0 : index
      %c0_23 = arith.constant 0 : index
      %c0_24 = arith.constant 0 : index
      %41 = vector.load %arg8[%c0_22, %c0_23, %c0_24] : memref<1x1x120xf32, #tpu.memory_space<vmem>>, vector<1x1x120xf32>
      tpu.vector_store %arg8[%c0_22, %c0_23, %c0_24], %40 {strides = array<i32>} : memref<1x1x120xf32, #tpu.memory_space<vmem>>, vector<1x1x120xf32>,
    } else {
    }
    %c0_i32_12 = arith.constant 0 : i32
    %16 = arith.cmpi ne, %arg0, %c0_i32_12 : i32
    %17 = arith.extui %16 : i1 to i32
    %c0_i32_13 = arith.constant 0 : i32
    %18 = arith.cmpi ne, %17, %c0_i32_13 : i32
    scf.if %18 {
      %19 = math.absf %12 : vector<8x120xf32>
      %cst_14 = arith.constant dense<0.000000e+00> : vector<120xf32>
      %20 = vector.multi_reduction <add>, %19, %cst_14 [0] : vector<8x120xf32> to vector<120xf32>
      %21 = vector.shape_cast %20 : vector<120xf32> to vector<1x120xf32>
      %22 = vector.shape_cast %21 : vector<1x120xf32> to vector<1x1x120xf32>
      %c0_15 = arith.constant 0 : index
      %c0_16 = arith.constant 0 : index
      %c0_17 = arith.constant 0 : index
      %23 = vector.load %arg7[%c0_15, %c0_16, %c0_17] : memref<1x1x120xf32, #tpu.memory_space<vmem>>, vector<1x1x120xf32>
      tpu.vector_store %arg7[%c0_15, %c0_16, %c0_17], %22 {strides = array<i32>} : memref<1x1x120xf32, #tpu.memory_space<vmem>>, vector<1x1x120xf32>,
      %cst_18 = arith.constant dense<0.000000e+00> : vector<120xf32>
      %24 = vector.multi_reduction <add>, %12, %cst_18 [0] : vector<8x120xf32> to vector<120xf32>
      %25 = vector.shape_cast %24 : vector<120xf32> to vector<1x120xf32>
      %26 = vector.shape_cast %25 : vector<1x120xf32> to vector<1x1x120xf32>
      %c0_19 = arith.constant 0 : index
      %c0_20 = arith.constant 0 : index
      %c0_21 = arith.constant 0 : index
      %27 = vector.load %arg8[%c0_19, %c0_20, %c0_21] : memref<1x1x120xf32, #tpu.memory_space<vmem>>, vector<1x1x120xf32>
      tpu.vector_store %arg8[%c0_19, %c0_20, %c0_21], %26 {strides = array<i32>} : memref<1x1x120xf32, #tpu.memory_space<vmem>>, vector<1x1x120xf32>,
    } else {
    }
    return
  }
  func.func @transform_0(%arg0: i32) -> (i32, i32) {
    %c0_i32 = arith.constant 0 : i32
    %c0_i32_0 = arith.constant 0 : i32
    return %arg0, %c0_i32 : i32, i32
  }
  func.func @transform_1(%arg0: i32) -> (i32, i32) {
    %c0_i32 = arith.constant 0 : i32
    %c0_i32_0 = arith.constant 0 : i32
    %c0_i32_1 = arith.constant 0 : i32
    return %c0_i32, %c0_i32_0 : i32, i32
  }
  func.func @transform_2(%arg0: i32) -> (i32, i32) {
    %c0_i32 = arith.constant 0 : i32
    %c0_i32_0 = arith.constant 0 : i32
    %c0_i32_1 = arith.constant 0 : i32
    return %c0_i32, %c0_i32_0 : i32, i32
  }
  func.func @transform_3(%arg0: i32) -> (i32, i32) {
    %c0_i32 = arith.constant 0 : i32
    %c0_i32_0 = arith.constant 0 : i32
    %c0_i32_1 = arith.constant 0 : i32
    return %c0_i32, %c0_i32_0 : i32, i32
  }
  func.func @transform_4(%arg0: i32) -> (i32, i32) {
    %c0_i32 = arith.constant 0 : i32
    %c0_i32_0 = arith.constant 0 : i32
    %c0_i32_1 = arith.constant 0 : i32
    return %c0_i32, %c0_i32_0 : i32, i32
  }
  func.func @transform_5(%arg0: i32) -> (i32, i32) {
    %c0_i32 = arith.constant 0 : i32
    %c0_i32_0 = arith.constant 0 : i32
    %c0_i32_1 = arith.constant 0 : i32
    return %c0_i32, %c0_i32_0 : i32, i32
  }
  func.func @transform_6(%arg0: i32) -> (i32, i32, i32) {
    %c0_i32 = arith.constant 0 : i32
    %c0_i32_0 = arith.constant 0 : i32
    %c0_i32_1 = arith.constant 0 : i32
    return %arg0, %c0_i32, %c0_i32_0 : i32, i32, i32
  }
  func.func @transform_7(%arg0: i32) -> (i32, i32, i32) {
    %c0_i32 = arith.constant 0 : i32
    %c0_i32_0 = arith.constant 0 : i32
    %c0_i32_1 = arith.constant 0 : i32
    return %arg0, %c0_i32, %c0_i32_0 : i32, i32, i32
  }
}

</mosaic_0001>

<llo_original>
// kernel: fixed_hidden_mlp.1
$region0: #{fixed_hidden_mlp.1}
  #allocation0 [shape = 'u32[]', space=smem, size = 0x4, offset = 0x4, fixed_abs, tag = 'smem constant byte address 0x4 - core index']
  #allocation1 [shape = 'u32[144,128]{1,0:T(1,128)}', space=vmem, size = 0x12000, scoped, tag = 'internal scratch']
  %s0 = inlined_call_operand.vmem [shape: f32[8,120], index: 0, kind: input, shape index: {}]
  %s1 = inlined_call_operand.vmem [shape: s32[1,120], index: 1, kind: input, shape index: {}]
  %s2 = inlined_call_operand.vmem [shape: f32[120,120], index: 2, kind: input, shape index: {}]
  %s3 = inlined_call_operand.vmem [shape: f32[1,120], index: 3, kind: input, shape index: {}]
  %s4 = inlined_call_operand.vmem [shape: f32[120,120], index: 4, kind: input, shape index: {}]
  %s5 = inlined_call_operand.vmem [shape: f32[1,120], index: 5, kind: input, shape index: {}]
  %s6 = inlined_call_operand.vmem [shape: f32[1,1,120], index: 6, kind: output, shape index: {0}]
  %s7 = inlined_call_operand.vmem [shape: f32[1,1,120], index: 7, kind: output, shape index: {1}]
  %8 = xla_tuple %s6, %s7
  %s9 = sld [smem:[#allocation0]]
  $region50: #{fixed_hidden_mlp.1} parent=0
    _
  %s11 = ssub.s32 1, %s9
  %s12 = scalar_select 0, %s11, %s9
  // Predicated region
  $region2: #{fixed_hidden_mlp.1} parent=0 // pred_check
    _
  $region3: #{fixed_hidden_mlp.1} parent=0 // pred_check_branch
    %14 = sbr.rel (0) target = $region5
  $region4: #{fixed_hidden_mlp.1} parent=0 // pred_region
    _
  $region5: #{fixed_hidden_mlp.1} parent=0 // pred_fallthru
    _
  // Predicated region
  $region6: #{fixed_hidden_mlp.1} parent=0 // pred_check
    _
  $region7: #{fixed_hidden_mlp.1} parent=0 // pred_check_branch
    %16 = sbr.rel (0) target = $region9
  $region8: #{fixed_hidden_mlp.1} parent=0 // pred_region
    _
  $region9: #{fixed_hidden_mlp.1} parent=0 // pred_fallthru
    _
  // Predicated region
  $region10: #{fixed_hidden_mlp.1} parent=0 // pred_check
    _
  $region11: #{fixed_hidden_mlp.1} parent=0 // pred_check_branch
    %18 = sbr.rel (0) target = $region13
  $region12: #{fixed_hidden_mlp.1} parent=0 // pred_region
    _
  $region13: #{fixed_hidden_mlp.1} parent=0 // pred_fallthru
    _
  // Predicated region
  $region14: #{fixed_hidden_mlp.1} parent=0 // pred_check
    _
  $region15: #{fixed_hidden_mlp.1} parent=0 // pred_check_branch
    %20 = sbr.rel (0) target = $region17
  $region16: #{fixed_hidden_mlp.1} parent=0 // pred_region
    _
  $region17: #{fixed_hidden_mlp.1} parent=0 // pred_fallthru
    _
  // Predicated region
  $region18: #{fixed_hidden_mlp.1} parent=0 // pred_check
    _
  $region19: #{fixed_hidden_mlp.1} parent=0 // pred_check_branch
    %22 = sbr.rel (0) target = $region21
  $region20: #{fixed_hidden_mlp.1} parent=0 // pred_region
    _
  $region21: #{fixed_hidden_mlp.1} parent=0 // pred_fallthru
    _
  // Predicated region
  $region22: #{fixed_hidden_mlp.1} parent=0 // pred_check
    _
  $region23: #{fixed_hidden_mlp.1} parent=0 // pred_check_branch
    %24 = sbr.rel (0) target = $region25
  $region24: #{fixed_hidden_mlp.1} parent=0 // pred_region
    _
  $region25: #{fixed_hidden_mlp.1} parent=0 // pred_fallthru
    _
  %v25 = vld [vmem:[%s0] sm:$0xff]
  %v26 = vld [vmem:[%s2] sm:$0xff]
  %v27 = vld [vmem:[%s2 + $0x8] sm:$0xff]
  %v28 = vld [vmem:[%s2 + $0x10] sm:$0xff]
  %v29 = vld [vmem:[%s2 + $0x18] sm:$0xff]
  %v30 = vld [vmem:[%s2 + $0x20] sm:$0xff]
  %v31 = vld [vmem:[%s2 + $0x28] sm:$0xff]
  %v32 = vld [vmem:[%s2 + $0x30] sm:$0xff]
  %v33 = vld [vmem:[%s2 + $0x38] sm:$0xff]
  %v34 = vld [vmem:[%s2 + $0x40] sm:$0xff]
  %v35 = vld [vmem:[%s2 + $0x48] sm:$0xff]
  %v36 = vld [vmem:[%s2 + $0x50] sm:$0xff]
  %v37 = vld [vmem:[%s2 + $0x58] sm:$0xff]
  %v38 = vld [vmem:[%s2 + $0x60] sm:$0xff]
  %v39 = vld [vmem:[%s2 + $0x68] sm:$0xff]
  %v40 = vld [vmem:[%s2 + $0x70] sm:$0xff]
  %v41 = vld [vmem:[%s3] sm:$0x1]
  %v43 = vlaneseq
  %v44 = vshrl.u32 %v43, 7
  %v45 = vsub.s32 0, %v44
  %v46 = vrot.slane %v41, %v45
  %vm48 = vcmask 982016
  %v50 = vsel %vm48, %v25, 0
  %52 = vmatprep.subr.mxu0 0.0
  %53 = vmatpush1.msra.mxu0 0.0
  %54 = vmatprep.subr.mxu0 0.0
  %55 = vmatpush1.msra.mxu0 %v40
  %56 = vmatprep.subr.mxu0 0.0
  %57 = vmatpush1.msra.mxu0 %v39
  %58 = vmatprep.subr.mxu0 0.0
  %59 = vmatpush1.msra.mxu0 %v38
  %60 = vmatprep.subr.mxu0 0.0
  %61 = vmatpush1.msra.mxu0 %v37
  %62 = vmatprep.subr.mxu0 0.0
  %63 = vmatpush1.msra.mxu0 %v36
  %64 = vmatprep.subr.mxu0 0.0
  %65 = vmatpush1.msra.mxu0 %v35
  %66 = vmatprep.subr.mxu0 0.0
  %67 = vmatpush1.msra.mxu0 %v34
  %68 = vmatprep.subr.mxu0 0.0
  %69 = vmatpush1.msra.mxu0 %v33
  %70 = vmatprep.subr.mxu0 0.0
  %71 = vmatpush1.msra.mxu0 %v32
  %72 = vmatprep.subr.mxu0 0.0
  %73 = vmatpush1.msra.mxu0 %v31
  %74 = vmatprep.subr.mxu0 0.0
  %75 = vmatpush1.msra.mxu0 %v30
  %76 = vmatprep.subr.mxu0 0.0
  %77 = vmatpush1.msra.mxu0 %v29
  %78 = vmatprep.subr.mxu0 0.0
  %79 = vmatpush1.msra.mxu0 %v28
  %80 = vmatprep.subr.mxu0 0.0
  %81 = vmatpush1.msra.mxu0 %v27
  %82 = vmatprep.subr.mxu0 0.0
  %83 = vmatpush1.msra.mxu0 %v26
  %84 = vmatprep.subr.mxu0 0.0
  %85 = vmatpush2.msra.mxu0 0.0
  %86 = vmatprep.subr.mxu0 0.0
  %87 = vmatpush2.msra.mxu0 0.0
  %88 = vmatprep.subr.mxu0 0.0
  %89 = vmatpush2.msra.mxu0 0.0
  %90 = vmatprep.subr.mxu0 0.0
  %91 = vmatpush2.msra.mxu0 0.0
  %92 = vmatprep.subr.mxu0 0.0
  %93 = vmatpush2.msra.mxu0 0.0
  %94 = vmatprep.subr.mxu0 0.0
  %95 = vmatpush2.msra.mxu0 0.0
  %96 = vmatprep.subr.mxu0 0.0
  %97 = vmatpush2.msra.mxu0 0.0
  %98 = vmatprep.subr.mxu0 0.0
  %99 = vmatpush2.msra.mxu0 0.0
  %100 = vmatprep.subr.mxu0 0.0
  %101 = vmatpush2.msra.mxu0 0.0
  %102 = vmatprep.subr.mxu0 0.0
  %103 = vmatpush2.msra.mxu0 0.0
  %104 = vmatprep.subr.mxu0 0.0
  %105 = vmatpush2.msra.mxu0 0.0
  %106 = vmatprep.subr.mxu0 0.0
  %107 = vmatpush2.msra.mxu0 0.0
  %108 = vmatprep.subr.mxu0 0.0
  %109 = vmatpush2.msra.mxu0 0.0
  %110 = vmatprep.subr.mxu0 0.0
  %111 = vmatpush2.msra.mxu0 0.0
  %112 = vmatprep.subr.mxu0 0.0
  %113 = vmatpush2.msra.mxu0 0.0
  %114 = vmatprep.subr.mxu0 0.0
  %115 = vmatpush2.msra.mxu0 0.0
  %116 = vmatprep.mubr.f32.mxu0 0.0
  %117 = vmatmul.mubr.f32.gmra.mxu0 %v50
  %v118 = vpop.f32.mrf.mxu0
  %v119 = vadd.f32 %v46, %v118
  %v120 = vpop.f32.mrf.mxu0
  %121 = vdwg.mxu0
  %v122 = vmax.f32 %v119, 0.0
  %v123 = vld [vmem:[%s4] sm:$0xff]
  %v124 = vld [vmem:[%s4 + $0x8] sm:$0xff]
  %v125 = vld [vmem:[%s4 + $0x10] sm:$0xff]
  %v126 = vld [vmem:[%s4 + $0x18] sm:$0xff]
  %v127 = vld [vmem:[%s4 + $0x20] sm:$0xff]
  %v128 = vld [vmem:[%s4 + $0x28] sm:$0xff]
  %v129 = vld [vmem:[%s4 + $0x30] sm:$0xff]
  %v130 = vld [vmem:[%s4 + $0x38] sm:$0xff]
  %v131 = vld [vmem:[%s4 + $0x40] sm:$0xff]
  %v132 = vld [vmem:[%s4 + $0x48] sm:$0xff]
  %v133 = vld [vmem:[%s4 + $0x50] sm:$0xff]
  %v134 = vld [vmem:[%s4 + $0x58] sm:$0xff]
  %v135 = vld [vmem:[%s4 + $0x60] sm:$0xff]
  %v136 = vld [vmem:[%s4 + $0x68] sm:$0xff]
  %v137 = vld [vmem:[%s4 + $0x70] sm:$0xff]
  %v138 = vld [vmem:[%s5] sm:$0x1]
  %v140 = vlaneseq
  %v141 = vshrl.u32 %v140, 7
  %v142 = vsub.s32 0, %v141
  %v143 = vrot.slane %v138, %v142
  %v146 = vsel %vm48, %v122, 0
  %148 = vmatprep.subr.mxu0 0.0
  %149 = vmatpush1.msra.mxu0 0.0
  %150 = vmatprep.subr.mxu0 0.0
  %151 = vmatpush1.msra.mxu0 %v137
  %152 = vmatprep.subr.mxu0 0.0
  %153 = vmatpush1.msra.mxu0 %v136
  %154 = vmatprep.subr.mxu0 0.0
  %155 = vmatpush1.msra.mxu0 %v135
  %156 = vmatprep.subr.mxu0 0.0
  %157 = vmatpush1.msra.mxu0 %v134
  %158 = vmatprep.subr.mxu0 0.0
  %159 = vmatpush1.msra.mxu0 %v133
  %160 = vmatprep.subr.mxu0 0.0
  %161 = vmatpush1.msra.mxu0 %v132
  %162 = vmatprep.subr.mxu0 0.0
  %163 = vmatpush1.msra.mxu0 %v131
  %164 = vmatprep.subr.mxu0 0.0
  %165 = vmatpush1.msra.mxu0 %v130
  %166 = vmatprep.subr.mxu0 0.0
  %167 = vmatpush1.msra.mxu0 %v129
  %168 = vmatprep.subr.mxu0 0.0
  %169 = vmatpush1.msra.mxu0 %v128
  %170 = vmatprep.subr.mxu0 0.0
  %171 = vmatpush1.msra.mxu0 %v127
  %172 = vmatprep.subr.mxu0 0.0
  %173 = vmatpush1.msra.mxu0 %v126
  %174 = vmatprep.subr.mxu0 0.0
  %175 = vmatpush1.msra.mxu0 %v125
  %176 = vmatprep.subr.mxu0 0.0
  %177 = vmatpush1.msra.mxu0 %v124
  %178 = vmatprep.subr.mxu0 0.0
  %179 = vmatpush1.msra.mxu0 %v123
  %180 = vmatprep.subr.mxu0 0.0
  %181 = vmatpush2.msra.mxu0 0.0
  %182 = vmatprep.subr.mxu0 0.0
  %183 = vmatpush2.msra.mxu0 0.0
  %184 = vmatprep.subr.mxu0 0.0
  %185 = vmatpush2.msra.mxu0 0.0
  %186 = vmatprep.subr.mxu0 0.0
  %187 = vmatpush2.msra.mxu0 0.0
  %188 = vmatprep.subr.mxu0 0.0
  %189 = vmatpush2.msra.mxu0 0.0
  %190 = vmatprep.subr.mxu0 0.0
  %191 = vmatpush2.msra.mxu0 0.0
  %192 = vmatprep.subr.mxu0 0.0
  %193 = vmatpush2.msra.mxu0 0.0
  %194 = vmatprep.subr.mxu0 0.0
  %195 = vmatpush2.msra.mxu0 0.0
  %196 = vmatprep.subr.mxu0 0.0
  %197 = vmatpush2.msra.mxu0 0.0
  %198 = vmatprep.subr.mxu0 0.0
  %199 = vmatpush2.msra.mxu0 0.0
  %200 = vmatprep.subr.mxu0 0.0
  %201 = vmatpush2.msra.mxu0 0.0
  %202 = vmatprep.subr.mxu0 0.0
  %203 = vmatpush2.msra.mxu0 0.0
  %204 = vmatprep.subr.mxu0 0.0
  %205 = vmatpush2.msra.mxu0 0.0
  %206 = vmatprep.subr.mxu0 0.0
  %207 = vmatpush2.msra.mxu0 0.0
  %208 = vmatprep.subr.mxu0 0.0
  %209 = vmatpush2.msra.mxu0 0.0
  %210 = vmatprep.subr.mxu0 0.0
  %211 = vmatpush2.msra.mxu0 0.0
  %212 = vmatprep.mubr.f32.mxu0 0.0
  %213 = vmatmul.mubr.f32.gmra.mxu0 %v146
  %v214 = vpop.f32.mrf.mxu0
  %v215 = vadd.f32 %v143, %v214
  %v216 = vpop.f32.mrf.mxu0
  %217 = vdwg.mxu0
  %p218 = scmp.eq.s32.totalorder 0, 0
  // Predicated region
  $region26: #{fixed_hidden_mlp.1} parent=0 // pred_check
    %p219 = pneg %p218
  $region27: #{fixed_hidden_mlp.1} parent=0 // pred_check_branch
    %221 = sbr.rel (%p219) target = $region29
  $region28: #{fixed_hidden_mlp.1} parent=0 // pred_region
    %v222 = vlaneseq
    %v223 = vshrl.u32 %v222, 7
    %s224 = smul.u32 0, 8
    %v225 = vstv %s224
    %v226 = vadd.s32 %v225, %v223
    %v227 = vmul.u32 %v226, 6
    %v228 = vld [vmem:[%s1] sm:$0x1]
    %v229 = vlaneseq
    %v230 = vshrl.u32 %v229, 7
    %v231 = vsub.s32 0, %v230
    %v232 = vrot.slane %v228, %v231
    %v233 = vadd.s32 %v227, %v232
    %vm234 = vcmp.lt.s32.totalorder %v233, 2
    %v235 = vsel %vm234, %v215, 0.0
    %v236 = vand.u32 2147483647, %v235
    %v237 = vsel %vm48, %v236, 0.0
    %v238 = vrot.slane %v237, 4
    %v239 = vadd.f32 %v237, %v238
    %v240 = vrot.slane %v239, 2
    %v241 = vadd.f32 %v239, %v240
    %v242 = vrot.slane %v241, 1
    %v243 = vadd.f32 %v241, %v242
    %vm244 = vcmask 974848
    %245 = vst.msk [vmem:[%s6] sm:$0x1] %vm244, %v243
    %v246 = vsel %vm48, %v235, 0.0
    %v247 = vrot.slane %v246, 4
    %v248 = vadd.f32 %v246, %v247
    %v249 = vrot.slane %v248, 2
    %v250 = vadd.f32 %v248, %v249
    %v251 = vrot.slane %v250, 1
    %v252 = vadd.f32 %v250, %v251
    %253 = vst.msk [vmem:[%s7] sm:$0x1] %vm244, %v252
  $region29: #{fixed_hidden_mlp.1} parent=0 // pred_fallthru
    _
  %p254 = scmp.ne.s32.totalorder 0, 0
  // Predicated region
  $region30: #{fixed_hidden_mlp.1} parent=0 // pred_check
    %p255 = pneg %p254
  $region31: #{fixed_hidden_mlp.1} parent=0 // pred_check_branch
    %257 = sbr.rel (%p255) target = $region33
  $region32: #{fixed_hidden_mlp.1} parent=0 // pred_region
    %v258 = vand.u32 2147483647, %v215
    %v259 = vsel %vm48, %v258, 0.0
    %v260 = vrot.slane %v259, 4
    %v261 = vadd.f32 %v259, %v260
    %v262 = vrot.slane %v261, 2
    %v263 = vadd.f32 %v261, %v262
    %v264 = vrot.slane %v263, 1
    %v265 = vadd.f32 %v263, %v264
    %vm266 = vcmask 974848
    %267 = vst.msk [vmem:[%s6] sm:$0x1] %vm266, %v265
    %v268 = vsel %vm48, %v215, 0.0
    %v269 = vrot.slane %v268, 4
    %v270 = vadd.f32 %v268, %v269
    %v271 = vrot.slane %v270, 2
    %v272 = vadd.f32 %v270, %v271
    %v273 = vrot.slane %v272, 1
    %v274 = vadd.f32 %v272, %v273
    %275 = vst.msk [vmem:[%s7] sm:$0x1] %vm266, %v274
  $region33: #{fixed_hidden_mlp.1} parent=0 // pred_fallthru
    _
  // Predicated region
  $region34: #{fixed_hidden_mlp.1} parent=0 // pred_check
    _
  $region35: #{fixed_hidden_mlp.1} parent=0 // pred_check_branch
    %277 = sbr.rel (0) target = $region37
  $region36: #{fixed_hidden_mlp.1} parent=0 // pred_region
    _
  $region37: #{fixed_hidden_mlp.1} parent=0 // pred_fallthru
    _
  // Predicated region
  $region38: #{fixed_hidden_mlp.1} parent=0 // pred_check
    _
  $region39: #{fixed_hidden_mlp.1} parent=0 // pred_check_branch
    %279 = sbr.rel (0) target = $region41
  $region40: #{fixed_hidden_mlp.1} parent=0 // pred_region
    _
  $region41: #{fixed_hidden_mlp.1} parent=0 // pred_fallthru
    _
  // Predicated region
  $region42: #{fixed_hidden_mlp.1} parent=0 // pred_check
    _
  $region43: #{fixed_hidden_mlp.1} parent=0 // pred_check_branch
    %281 = sbr.rel (0) target = $region45
  $region44: #{fixed_hidden_mlp.1} parent=0 // pred_region
    _
  $region45: #{fixed_hidden_mlp.1} parent=0 // pred_fallthru
    _
  // Predicated region
  $region46: #{fixed_hidden_mlp.1} parent=0 // pred_check
    _
  $region47: #{fixed_hidden_mlp.1} parent=0 // pred_check_branch
    %283 = sbr.rel (0) target = $region49
  $region48: #{fixed_hidden_mlp.1} parent=0 // pred_region
    _
  $region49: #{fixed_hidden_mlp.1} parent=0 // pred_fallthru
    _

</llo_original>
